<compile_context>
chip_gen: v7x
topology: tpu7x:2x2x1
jax: 0.10.0
libtpu: 0.0.40
codegen_flags: <defaults>
</compile_context>

<pallas_src>
import functools

import jax
import jax.numpy as jnp
from jax import lax
from jax.experimental import pallas as pl
from jax.experimental.pallas import tpu as pltpu


def _rbf_block(zi, zj, gamma, use_bf16):
    """exp(-gamma * ||zi_a - zj_b||^2) for one (TB_i, TB_j) Gram tile."""
    if use_bf16:
        a, b = zi.astype(jnp.bfloat16), zj.astype(jnp.bfloat16)
    else:
        a, b = zi, zj
    # Gram tile on the MXU, contracting the feature axis directly (no transpose).
    g = lax.dot_general(a, b, (((1,), (1,)), ((), ())),
                        preferred_element_type=jnp.float32)            # (TBi, TBj)
    sq_i = jnp.sum(zi * zi, axis=1, keepdims=True)                     # (TBi, 1)
    # Row norms of the j-block laid out on lanes via a tiny ones-row matmul
    # (avoids a (TB,1)->(1,TB) relayout).
    ones_row = jnp.ones((1, zj.shape[1]), jnp.float32)
    sq_j = lax.dot_general(ones_row, zj * zj, (((1,), (1,)), ((), ())),
                           preferred_element_type=jnp.float32)         # (1, TBj)
    d2 = sq_i + sq_j - 2.0 * g
    return jnp.exp(-gamma * d2)


def _hsic_unbiased_kernel(xi_ref, xj_ref, yi_ref, yj_ref, o_ref,
                          colk, coll, s_k, s_l, s_kl, s_dot,
                          *, gamma_x, gamma_y, n_true, padded, use_bf16):
    j = pl.program_id(0)              # Gram column-block index (outer)
    i = pl.program_id(1)              # Gram row-block index (inner)
    last_i = pl.num_programs(1) - 1
    last_j = pl.num_programs(0) - 1
    nf = float(n_true)

    @pl.when(jnp.logical_and(i == 0, j == 0))
    def _init_global():
        s_k[...] = jnp.zeros_like(s_k)
        s_l[...] = jnp.zeros_like(s_l)
        s_kl[...] = jnp.zeros_like(s_kl)
        s_dot[...] = jnp.zeros_like(s_dot)

    @pl.when(i == 0)
    def _init_column_block():
        colk[...] = jnp.zeros_like(colk)
        coll[...] = jnp.zeros_like(coll)

    k_blk = _rbf_block(xi_ref[...], xj_ref[...], gamma_x, use_bf16)    # (TB, TB)
    l_blk = _rbf_block(yi_ref[...], yj_ref[...], gamma_y, use_bf16)    # (TB, TB)

    tb = k_blk.shape[0]
    if padded:   # static flag: masks are only emitted when N was actually padded
        rv = (lax.broadcasted_iota(jnp.int32, (tb, 1), 0) + i * tb < n_true
              ).astype(jnp.float32)                                    # valid rows
        cv = (lax.broadcasted_iota(jnp.int32, (1, tb), 1) + j * tb < n_true
              ).astype(jnp.float32)                                    # valid cols
        k_blk = k_blk * rv
        l_blk = l_blk * rv
        kl_blk = k_blk * l_blk * cv
    else:
        cv = None
        kl_blk = k_blk * l_blk

    # Online statistics.  With tK = K - 1 (RBF diag == 1) everything reduces to
    # sums over K and L:  sum(tK) = sum(K) - N^2,  colsum(tK) = colsum(K) - N,
    # tr(tK@tL) = sum(tK*tL) = sum(K*L) - sum(K) - sum(L) + N^2.
    colk[...] += jnp.sum(k_blk, axis=0, keepdims=True)                 # (1, TB)
    coll[...] += jnp.sum(l_blk, axis=0, keepdims=True)
    s_kl[...] += jnp.sum(kl_blk, keepdims=True)

    @pl.when(i == last_i)
    def _finish_column_block():
        ck = colk[...]
        cl = coll[...]
        dk = ck - nf                 # colsum(tK) for this column block
        dl = cl - nf
        if padded:
            s_k[...] += jnp.sum(ck * cv, keepdims=True)
            s_l[...] += jnp.sum(cl * cv, keepdims=True)
            s_dot[...] += jnp.sum(dk * dl * cv, keepdims=True)
        else:
            s_k[...] += jnp.sum(ck, keepdims=True)
            s_l[...] += jnp.sum(cl, keepdims=True)
            s_dot[...] += jnp.sum(dk * dl, keepdims=True)

    @pl.when(jnp.logical_and(i == last_i, j == last_j))
    def _finalize():
        n_sq = nf * nf
        sum_tk = s_k[...] - n_sq
        sum_tl = s_l[...] - n_sq
        trace_kl = s_kl[...] - s_k[...] - s_l[...] + n_sq
        hsic = (trace_kl
                + sum_tk * sum_tl / ((nf - 1.0) * (nf - 2.0))
                - 2.0 * s_dot[...] / (nf - 2.0))
        o_ref[...] = hsic / (nf * (nf - 3.0))


def _round_up(v, m):
    return ((v + m - 1) // m) * m


def hsic_unbiased(input1, input2, sigma_x=1.0, sigma_y=None, *,
                  max_tile=256, use_bf16_gram=False):
    """Pallas implementation of HSIC(sigma_x, sigma_y, algorithm='unbiased').forward."""
    if sigma_y is None:
        sigma_y = sigma_x
    x = jnp.asarray(input1, jnp.float32).reshape(input1.shape[0], -1)
    y = jnp.asarray(input2, jnp.float32).reshape(input2.shape[0], -1)
    n = x.shape[0]
    # NOTE: like the PyTorch source, N <= 3 divides by zero in the estimator.
    gamma_x = 1.0 / (2.0 * float(sigma_x) ** 2)
    gamma_y = 1.0 / (2.0 * float(sigma_y) ** 2)

    def pad_features(z):
        d = z.shape[1]
        d_pad = _round_up(max(d, 1), 128)       # lane-dense, MXU-aligned contraction
        return jnp.pad(z, ((0, 0), (0, d_pad - d))) if d_pad != d else z

    x = pad_features(x)
    y = pad_features(y)

    # Gram tile edge: whole N when it fits one tile, else a multiple of 8 (<= max_tile);
    # rows are zero-padded to a tile multiple and masked inside the kernel.
    if n <= max_tile:
        tb = n
    else:
        tb = max(8, (max_tile // 8) * 8)
    n_pad = _round_up(n, tb)
    if n_pad != n:
        x = jnp.pad(x, ((0, n_pad - n), (0, 0)))
        y = jnp.pad(y, ((0, n_pad - n), (0, 0)))
    padded = n_pad != n
    nb = n_pad // tb
    dx, dy = x.shape[1], y.shape[1]

    kernel = functools.partial(
        _hsic_unbiased_kernel, gamma_x=gamma_x, gamma_y=gamma_y,
        n_true=n, padded=padded, use_bf16=use_bf16_gram)

    out = pl.pallas_call(
        kernel,
        out_shape=jax.ShapeDtypeStruct((1, 1), jnp.float32),
        grid=(nb, nb),                                     # (col blocks j, row blocks i)
        in_specs=[
            pl.BlockSpec((tb, dx), lambda j, i: (i, 0)),   # X rows of the Gram tile
            pl.BlockSpec((tb, dx), lambda j, i: (j, 0)),   # X cols (constant over i)
            pl.BlockSpec((tb, dy), lambda j, i: (i, 0)),   # Y rows
            pl.BlockSpec((tb, dy), lambda j, i: (j, 0)),   # Y cols
        ],
        out_specs=pl.BlockSpec((1, 1), lambda j, i: (0, 0)),
        scratch_shapes=[
            pltpu.VMEM((1, tb), jnp.float32),   # column sums of K for current j block
            pltpu.VMEM((1, tb), jnp.float32),   # column sums of L for current j block
            pltpu.VMEM((1, 1), jnp.float32),    # running sum(K)
            pltpu.VMEM((1, 1), jnp.float32),    # running sum(L)
            pltpu.VMEM((1, 1), jnp.float32),    # running sum(K*L)
            pltpu.VMEM((1, 1), jnp.float32),    # running dot(colsum(tK), colsum(tL))
        ],
        compiler_params=pltpu.CompilerParams(
            dimension_semantics=("arbitrary", "arbitrary"),
            vmem_limit_bytes=48 * 1024 * 1024,
        ),
    )(x, x, y, y)
    return out[0, 0]


def _hsic_unbiased_ref(input1, input2, sigma_x=1.0, sigma_y=None):
    """Pure-JAX reference mirroring the PyTorch code (including the diag-broadcast)."""
    if sigma_y is None:
        sigma_y = sigma_x
    x = jnp.asarray(input1, jnp.float32).reshape(input1.shape[0], -1)
    y = jnp.asarray(input2, jnp.float32).reshape(input2.shape[0], -1)

    def rbf(z, sigma):
        g = z @ z.T
        sq = jnp.diagonal(g)
        d2 = -2.0 * g + sq[:, None] + sq[None, :]
        return jnp.exp(-d2 / (2.0 * sigma ** 2))

    K = rbf(x, sigma_x)
    L = rbf(y, sigma_y)
    tK = K - jnp.diagonal(K)[None, :]
    tL = L - jnp.diagonal(L)[None, :]
    n = x.shape[0]
    hsic = (jnp.trace(tK @ tL)
            + jnp.sum(tK) * jnp.sum(tL) / (n - 1) / (n - 2)
            - 2.0 * jnp.dot(jnp.sum(tK, 0), jnp.sum(tL, 0)) / (n - 2))
    return hsic / (n * (n - 3))


if __name__ == "__main__":
    key = jax.random.PRNGKey(0)
    k1, k2, k3, k4 = jax.random.split(key, 4)

    # Case 1: single Gram tile (m = 8 observations, 32-/24-dim features, correlated).
    x1 = jax.random.normal(k1, (8, 32), dtype=jnp.float32)
    y1 = x1[:, :24] + 0.3 * jax.random.normal(k2, (8, 24), dtype=jnp.float32)
    out1 = jax.block_until_ready(hsic_unbiased(x1, y1, sigma_x=6.0))
    ref1 = _hsic_unbiased_ref(x1, y1, sigma_x=6.0)
    assert jnp.allclose(out1, ref1, rtol=1e-4, atol=1e-5), (out1, ref1)

    # Same inputs through the bf16-Gram fast path (v6e/v7x MXU operands); squared
    # distances lose a few bits, so only a loose consistency check.
    out1_bf16 = jax.block_until_ready(
        hsic_unbiased(x1, y1, sigma_x=6.0, use_bf16_gram=True))
    assert bool(jnp.isfinite(out1_bf16))
    assert abs(float(out1_bf16) - float(out1)) < 5e-2 * (1.0 + abs(float(out1)))

    # Case 2: forces the tiled + row-masked path (N=20 padded to 24, 3x3 grid of
    # 8x8 Gram tiles, different feature dims).
    x2 = jax.random.normal(k3, (20, 40), dtype=jnp.float32)
    y2 = 0.7 * x2[:, :32] + 0.5 * jax.random.normal(k4, (20, 32), dtype=jnp.float32)
    out2 = jax.block_until_ready(hsic_unbiased(x2, y2, sigma_x=8.0, max_tile=8))
    ref2 = _hsic_unbiased_ref(x2, y2, sigma_x=8.0)
    assert jnp.allclose(out2, ref2, rtol=1e-4, atol=1e-5), (out2, ref2)

    print("KERNEL_OK")
</pallas_src>

<mosaic_0001>
module attributes {stable_mosaic.version = 11 : i64} {
  func.func @_hsic_unbiased_kernel(%arg0: i32, %arg1: i32, %arg2: memref<8x128xf32, #tpu.memory_space<vmem>>, %arg3: memref<8x128xf32, #tpu.memory_space<vmem>>, %arg4: memref<8x128xf32, #tpu.memory_space<vmem>>, %arg5: memref<8x128xf32, #tpu.memory_space<vmem>>, %arg6: memref<1x1xf32, #tpu.memory_space<vmem>>, %arg7: memref<1x8xf32, #tpu.memory_space<vmem>>, %arg8: memref<1x8xf32, #tpu.memory_space<vmem>>, %arg9: memref<1x1xf32, #tpu.memory_space<vmem>>, %arg10: memref<1x1xf32, #tpu.memory_space<vmem>>, %arg11: memref<1x1xf32, #tpu.memory_space<vmem>>, %arg12: memref<1x1xf32, #tpu.memory_space<vmem>>) attributes {dimension_semantics = [#tpu.dimension_semantics<arbitrary>, #tpu.dimension_semantics<arbitrary>], iteration_bounds = array<i64: 1, 1>, scalar_prefetch = 0 : i64, scratch_operands = 6 : i64, tpu.core_type = #tpu.core_type<tc>, window_params = [{transform_indices = @transform_0, window_bounds = array<i64: 8, 128>}, {transform_indices = @transform_1, window_bounds = array<i64: 8, 128>}, {transform_indices = @transform_2, window_bounds = array<i64: 8, 128>}, {transform_indices = @transform_3, window_bounds = array<i64: 8, 128>}, {pipeline_mode = #tpu.pipeline_mode<synchronous>, transform_indices = @transform_4, window_bounds = array<i64: 1, 1>}]} {
    %c0_i32 = arith.constant 0 : i32
    %0 = arith.cmpi eq, %arg1, %c0_i32 : i32
    %c0_i32_0 = arith.constant 0 : i32
    %1 = arith.cmpi eq, %arg0, %c0_i32_0 : i32
    %2 = arith.andi %0, %1 : i1
    %3 = arith.extui %2 : i1 to i32
    %c0_i32_1 = arith.constant 0 : i32
    %4 = arith.cmpi ne, %3, %c0_i32_1 : i32
    scf.if %4 {
      %cst_42 = arith.constant 0.000000e+00 : f32
      %71 = vector.broadcast %cst_42 : f32 to vector<1x1xf32>
      %c0_43 = arith.constant 0 : index
      %c0_44 = arith.constant 0 : index
      %72 = vector.load %arg9[%c0_43, %c0_44] : memref<1x1xf32, #tpu.memory_space<vmem>>, vector<1x1xf32>
      tpu.vector_store %arg9[%c0_43, %c0_44], %71 {strides = array<i32>} : memref<1x1xf32, #tpu.memory_space<vmem>>, vector<1x1xf32>,
      %cst_45 = arith.constant 0.000000e+00 : f32
      %73 = vector.broadcast %cst_45 : f32 to vector<1x1xf32>
      %c0_46 = arith.constant 0 : index
      %c0_47 = arith.constant 0 : index
      %74 = vector.load %arg10[%c0_46, %c0_47] : memref<1x1xf32, #tpu.memory_space<vmem>>, vector<1x1xf32>
      tpu.vector_store %arg10[%c0_46, %c0_47], %73 {strides = array<i32>} : memref<1x1xf32, #tpu.memory_space<vmem>>, vector<1x1xf32>,
      %cst_48 = arith.constant 0.000000e+00 : f32
      %75 = vector.broadcast %cst_48 : f32 to vector<1x1xf32>
      %c0_49 = arith.constant 0 : index
      %c0_50 = arith.constant 0 : index
      %76 = vector.load %arg11[%c0_49, %c0_50] : memref<1x1xf32, #tpu.memory_space<vmem>>, vector<1x1xf32>
      tpu.vector_store %arg11[%c0_49, %c0_50], %75 {strides = array<i32>} : memref<1x1xf32, #tpu.memory_space<vmem>>, vector<1x1xf32>,
      %cst_51 = arith.constant 0.000000e+00 : f32
      %77 = vector.broadcast %cst_51 : f32 to vector<1x1xf32>
      %c0_52 = arith.constant 0 : index
      %c0_53 = arith.constant 0 : index
      %78 = vector.load %arg12[%c0_52, %c0_53] : memref<1x1xf32, #tpu.memory_space<vmem>>, vector<1x1xf32>
      tpu.vector_store %arg12[%c0_52, %c0_53], %77 {strides = array<i32>} : memref<1x1xf32, #tpu.memory_space<vmem>>, vector<1x1xf32>,
    } else {
    }
    %c0_i32_2 = arith.constant 0 : i32
    %5 = arith.cmpi eq, %arg1, %c0_i32_2 : i32
    %6 = arith.extui %5 : i1 to i32
    %c0_i32_3 = arith.constant 0 : i32
    %7 = arith.cmpi ne, %6, %c0_i32_3 : i32
    scf.if %7 {
      %cst_42 = arith.constant 0.000000e+00 : f32
      %71 = vector.broadcast %cst_42 : f32 to vector<1x8xf32>
      %c0_43 = arith.constant 0 : index
      %c0_44 = arith.constant 0 : index
      %72 = vector.load %arg7[%c0_43, %c0_44] : memref<1x8xf32, #tpu.memory_space<vmem>>, vector<1x8xf32>
      tpu.vector_store %arg7[%c0_43, %c0_44], %71 {strides = array<i32>} : memref<1x8xf32, #tpu.memory_space<vmem>>, vector<1x8xf32>,
      %cst_45 = arith.constant 0.000000e+00 : f32
      %73 = vector.broadcast %cst_45 : f32 to vector<1x8xf32>
      %c0_46 = arith.constant 0 : index
      %c0_47 = arith.constant 0 : index
      %74 = vector.load %arg8[%c0_46, %c0_47] : memref<1x8xf32, #tpu.memory_space<vmem>>, vector<1x8xf32>
      tpu.vector_store %arg8[%c0_46, %c0_47], %73 {strides = array<i32>} : memref<1x8xf32, #tpu.memory_space<vmem>>, vector<1x8xf32>,
    } else {
    }
    %c0 = arith.constant 0 : index
    %c0_4 = arith.constant 0 : index
    %8 = vector.load %arg2[%c0, %c0_4] : memref<8x128xf32, #tpu.memory_space<vmem>>, vector<8x128xf32>
    %c0_5 = arith.constant 0 : index
    %c0_6 = arith.constant 0 : index
    %9 = vector.load %arg3[%c0_5, %c0_6] : memref<8x128xf32, #tpu.memory_space<vmem>>, vector<8x128xf32>
    %cst = arith.constant dense<0.000000e+00> : vector<8x8xf32>
    %10 = tpu.matmul %8, %9, %cst {dimension_numbers = #tpu.dot_dimension_numbers<[1], [1], [0], [0], [0, 0, 1, 0], [], []>} : vector<8x128xf32>, vector<8x128xf32>, vector<8x8xf32> -> vector<8x8xf32>
    %11 = arith.mulf %8, %8 : vector<8x128xf32>
    %cst_7 = arith.constant dense<0.000000e+00> : vector<8xf32>
    %12 = vector.multi_reduction <add>, %11, %cst_7 [1] : vector<8x128xf32> to vector<8xf32>
    %13 = vector.shape_cast %12 : vector<8xf32> to vector<8x1xf32>
    %cst_8 = arith.constant 1.000000e+00 : f32
    %14 = vector.broadcast %cst_8 : f32 to vector<1x128xf32>
    %15 = arith.mulf %9, %9 : vector<8x128xf32>
    %cst_9 = arith.constant dense<0.000000e+00> : vector<1x8xf32>
    %16 = tpu.matmul %14, %15, %cst_9 {dimension_numbers = #tpu.dot_dimension_numbers<[1], [1], [0], [0], [0, 0, 1, 0], [], []>} : vector<1x128xf32>, vector<8x128xf32>, vector<1x8xf32> -> vector<1x8xf32>
    %17 = vector.broadcast %13 : vector<8x1xf32> to vector<8x8xf32>
    %18 = vector.broadcast %16 : vector<1x8xf32> to vector<8x8xf32>
    %19 = arith.addf %17, %18 : vector<8x8xf32>
    %cst_10 = arith.constant 2.000000e+00 : f32
    %20 = vector.broadcast %cst_10 : f32 to vector<8x8xf32>
    %21 = arith.mulf %20, %10 : vector<8x8xf32>
    %22 = arith.subf %19, %21 : vector<8x8xf32>
    %cst_11 = arith.constant -0.013888889 : f32
    %23 = vector.broadcast %cst_11 : f32 to vector<8x8xf32>
    %24 = arith.mulf %23, %22 : vector<8x8xf32>
    %25 = math.exp %24 : vector<8x8xf32>
    %c0_12 = arith.constant 0 : index
    %c0_13 = arith.constant 0 : index
    %26 = vector.load %arg4[%c0_12, %c0_13] : memref<8x128xf32, #tpu.memory_space<vmem>>, vector<8x128xf32>
    %c0_14 = arith.constant 0 : index
    %c0_15 = arith.constant 0 : index
    %27 = vector.load %arg5[%c0_14, %c0_15] : memref<8x128xf32, #tpu.memory_space<vmem>>, vector<8x128xf32>
    %cst_16 = arith.constant dense<0.000000e+00> : vector<8x8xf32>
    %28 = tpu.matmul %26, %27, %cst_16 {dimension_numbers = #tpu.dot_dimension_numbers<[1], [1], [0], [0], [0, 0, 1, 0], [], []>} : vector<8x128xf32>, vector<8x128xf32>, vector<8x8xf32> -> vector<8x8xf32>
    %29 = arith.mulf %26, %26 : vector<8x128xf32>
    %cst_17 = arith.constant dense<0.000000e+00> : vector<8xf32>
    %30 = vector.multi_reduction <add>, %29, %cst_17 [1] : vector<8x128xf32> to vector<8xf32>
    %31 = vector.shape_cast %30 : vector<8xf32> to vector<8x1xf32>
    %cst_18 = arith.constant 1.000000e+00 : f32
    %32 = vector.broadcast %cst_18 : f32 to vector<1x128xf32>
    %33 = arith.mulf %27, %27 : vector<8x128xf32>
    %cst_19 = arith.constant dense<0.000000e+00> : vector<1x8xf32>
    %34 = tpu.matmul %32, %33, %cst_19 {dimension_numbers = #tpu.dot_dimension_numbers<[1], [1], [0], [0], [0, 0, 1, 0], [], []>} : vector<1x128xf32>, vector<8x128xf32>, vector<1x8xf32> -> vector<1x8xf32>
    %35 = vector.broadcast %31 : vector<8x1xf32> to vector<8x8xf32>
    %36 = vector.broadcast %34 : vector<1x8xf32> to vector<8x8xf32>
    %37 = arith.addf %35, %36 : vector<8x8xf32>
    %cst_20 = arith.constant 2.000000e+00 : f32
    %38 = vector.broadcast %cst_20 : f32 to vector<8x8xf32>
    %39 = arith.mulf %38, %28 : vector<8x8xf32>
    %40 = arith.subf %37, %39 : vector<8x8xf32>
    %cst_21 = arith.constant -0.013888889 : f32
    %41 = vector.broadcast %cst_21 : f32 to vector<8x8xf32>
    %42 = arith.mulf %41, %40 : vector<8x8xf32>
    %43 = math.exp %42 : vector<8x8xf32>
    %44 = arith.mulf %25, %43 : vector<8x8xf32>
    %c0_22 = arith.constant 0 : index
    %c0_23 = arith.constant 0 : index
    %45 = vector.load %arg7[%c0_22, %c0_23] : memref<1x8xf32, #tpu.memory_space<vmem>>, vector<1x8xf32>
    %cst_24 = arith.constant dense<0.000000e+00> : vector<8xf32>
    %46 = vector.multi_reduction <add>, %25, %cst_24 [0] : vector<8x8xf32> to vector<8xf32>
    %47 = vector.shape_cast %46 : vector<8xf32> to vector<1x8xf32>
    %48 = arith.addf %45, %47 : vector<1x8xf32>
    %c0_25 = arith.constant 0 : index
    %c0_26 = arith.constant 0 : index
    %49 = vector.load %arg7[%c0_25, %c0_26] : memref<1x8xf32, #tpu.memory_space<vmem>>, vector<1x8xf32>
    tpu.vector_store %arg7[%c0_25, %c0_26], %48 {strides = array<i32>} : memref<1x8xf32, #tpu.memory_space<vmem>>, vector<1x8xf32>,
    %c0_27 = arith.constant 0 : index
    %c0_28 = arith.constant 0 : index
    %50 = vector.load %arg8[%c0_27, %c0_28] : memref<1x8xf32, #tpu.memory_space<vmem>>, vector<1x8xf32>
    %cst_29 = arith.constant dense<0.000000e+00> : vector<8xf32>
    %51 = vector.multi_reduction <add>, %43, %cst_29 [0] : vector<8x8xf32> to vector<8xf32>
    %52 = vector.shape_cast %51 : vector<8xf32> to vector<1x8xf32>
    %53 = arith.addf %50, %52 : vector<1x8xf32>
    %c0_30 = arith.constant 0 : index
    %c0_31 = arith.constant 0 : index
    %54 = vector.load %arg8[%c0_30, %c0_31] : memref<1x8xf32, #tpu.memory_space<vmem>>, vector<1x8xf32>
    tpu.vector_store %arg8[%c0_30, %c0_31], %53 {strides = array<i32>} : memref<1x8xf32, #tpu.memory_space<vmem>>, vector<1x8xf32>,
    %c0_32 = arith.constant 0 : index
    %c0_33 = arith.constant 0 : index
    %55 = vector.load %arg11[%c0_32, %c0_33] : memref<1x1xf32, #tpu.memory_space<vmem>>, vector<1x1xf32>
    %56 = vector.shape_cast %44 : vector<8x8xf32> to vector<1x8x8xf32>
    %cst_34 = arith.constant dense<0.000000e+00> : vector<1xf32>
    %57 = vector.multi_reduction <add>, %56, %cst_34 [1, 2] : vector<1x8x8xf32> to vector<1xf32>
    %58 = vector.shape_cast %57 : vector<1xf32> to vector<1x1x1xf32>
    %59 = vector.extract %58[0, 0, 0] : f32 from vector<1x1x1xf32>
    %60 = vector.broadcast %59 : f32 to vector<1x1xf32>
    %61 = arith.addf %55, %60 : vector<1x1xf32>
    %c0_35 = arith.constant 0 : index
    %c0_36 = arith.constant 0 : index
    %62 = vector.load %arg11[%c0_35, %c0_36] : memref<1x1xf32, #tpu.memory_space<vmem>>, vector<1x1xf32>
    tpu.vector_store %arg11[%c0_35, %c0_36], %61 {strides = array<i32>} : memref<1x1xf32, #tpu.memory_space<vmem>>, vector<1x1xf32>,
    %c0_i32_37 = arith.constant 0 : i32
    %63 = arith.cmpi eq, %arg1, %c0_i32_37 : i32
    %64 = arith.extui %63 : i1 to i32
    %c0_i32_38 = arith.constant 0 : i32
    %65 = arith.cmpi ne, %64, %c0_i32_38 : i32
    scf.if %65 {
      %c0_42 = arith.constant 0 : index
      %c0_43 = arith.constant 0 : index
      %71 = vector.load %arg7[%c0_42, %c0_43] : memref<1x8xf32, #tpu.memory_space<vmem>>, vector<1x8xf32>
      %c0_44 = arith.constant 0 : index
      %c0_45 = arith.constant 0 : index
      %72 = vector.load %arg8[%c0_44, %c0_45] : memref<1x8xf32, #tpu.memory_space<vmem>>, vector<1x8xf32>
      %cst_46 = arith.constant 8.000000e+00 : f32
      %73 = vector.broadcast %cst_46 : f32 to vector<1x8xf32>
      %74 = arith.subf %71, %73 : vector<1x8xf32>
      %cst_47 = arith.constant 8.000000e+00 : f32
      %75 = vector.broadcast %cst_47 : f32 to vector<1x8xf32>
      %76 = arith.subf %72, %75 : vector<1x8xf32>
      %c0_48 = arith.constant 0 : index
      %c0_49 = arith.constant 0 : index
      %77 = vector.load %arg9[%c0_48, %c0_49] : memref<1x1xf32, #tpu.memory_space<vmem>>, vector<1x1xf32>
      %78 = vector.shape_cast %71 : vector<1x8xf32> to vector<1x1x8xf32>
      %cst_50 = arith.constant dense<0.000000e+00> : vector<1xf32>
      %79 = vector.multi_reduction <add>, %78, %cst_50 [1, 2] : vector<1x1x8xf32> to vector<1xf32>
      %80 = vector.shape_cast %79 : vector<1xf32> to vector<1x1x1xf32>
      %81 = vector.extract %80[0, 0, 0] : f32 from vector<1x1x1xf32>
      %82 = vector.broadcast %81 : f32 to vector<1x1xf32>
      %83 = arith.addf %77, %82 : vector<1x1xf32>
      %c0_51 = arith.constant 0 : index
      %c0_52 = arith.constant 0 : index
      %84 = vector.load %arg9[%c0_51, %c0_52] : memref<1x1xf32, #tpu.memory_space<vmem>>, vector<1x1xf32>
      tpu.vector_store %arg9[%c0_51, %c0_52], %83 {strides = array<i32>} : memref<1x1xf32, #tpu.memory_space<vmem>>, vector<1x1xf32>,
      %c0_53 = arith.constant 0 : index
      %c0_54 = arith.constant 0 : index
      %85 = vector.load %arg10[%c0_53, %c0_54] : memref<1x1xf32, #tpu.memory_space<vmem>>, vector<1x1xf32>
      %86 = vector.shape_cast %72 : vector<1x8xf32> to vector<1x1x8xf32>
      %cst_55 = arith.constant dense<0.000000e+00> : vector<1xf32>
      %87 = vector.multi_reduction <add>, %86, %cst_55 [1, 2] : vector<1x1x8xf32> to vector<1xf32>
      %88 = vector.shape_cast %87 : vector<1xf32> to vector<1x1x1xf32>
      %89 = vector.extract %88[0, 0, 0] : f32 from vector<1x1x1xf32>
      %90 = vector.broadcast %89 : f32 to vector<1x1xf32>
      %91 = arith.addf %85, %90 : vector<1x1xf32>
      %c0_56 = arith.constant 0 : index
      %c0_57 = arith.constant 0 : index
      %92 = vector.load %arg10[%c0_56, %c0_57] : memref<1x1xf32, #tpu.memory_space<vmem>>, vector<1x1xf32>
      tpu.vector_store %arg10[%c0_56, %c0_57], %91 {strides = array<i32>} : memref<1x1xf32, #tpu.memory_space<vmem>>, vector<1x1xf32>,
      %c0_58 = arith.constant 0 : index
      %c0_59 = arith.constant 0 : index
      %93 = vector.load %arg12[%c0_58, %c0_59] : memref<1x1xf32, #tpu.memory_space<vmem>>, vector<1x1xf32>
      %94 = arith.mulf %74, %76 : vector<1x8xf32>
      %95 = vector.shape_cast %94 : vector<1x8xf32> to vector<1x1x8xf32>
      %cst_60 = arith.constant dense<0.000000e+00> : vector<1xf32>
      %96 = vector.multi_reduction <add>, %95, %cst_60 [1, 2] : vector<1x1x8xf32> to vector<1xf32>
      %97 = vector.shape_cast %96 : vector<1xf32> to vector<1x1x1xf32>
      %98 = vector.extract %97[0, 0, 0] : f32 from vector<1x1x1xf32>
      %99 = vector.broadcast %98 : f32 to vector<1x1xf32>
      %100 = arith.addf %93, %99 : vector<1x1xf32>
      %c0_61 = arith.constant 0 : index
      %c0_62 = arith.constant 0 : index
      %101 = vector.load %arg12[%c0_61, %c0_62] : memref<1x1xf32, #tpu.memory_space<vmem>>, vector<1x1xf32>
      tpu.vector_store %arg12[%c0_61, %c0_62], %100 {strides = array<i32>} : memref<1x1xf32, #tpu.memory_space<vmem>>, vector<1x1xf32>,
    } else {
    }
    %c0_i32_39 = arith.constant 0 : i32
    %66 = arith.cmpi eq, %arg1, %c0_i32_39 : i32
    %c0_i32_40 = arith.constant 0 : i32
    %67 = arith.cmpi eq, %arg0, %c0_i32_40 : i32
    %68 = arith.andi %66, %67 : i1
    %69 = arith.extui %68 : i1 to i32
    %c0_i32_41 = arith.constant 0 : i32
    %70 = arith.cmpi ne, %69, %c0_i32_41 : i32
    scf.if %70 {
      %c0_42 = arith.constant 0 : index
      %c0_43 = arith.constant 0 : index
      %71 = vector.load %arg9[%c0_42, %c0_43] : memref<1x1xf32, #tpu.memory_space<vmem>>, vector<1x1xf32>
      %cst_44 = arith.constant 6.400000e+01 : f32
      %72 = vector.broadcast %cst_44 : f32 to vector<1x1xf32>
      %73 = arith.subf %71, %72 : vector<1x1xf32>
      %c0_45 = arith.constant 0 : index
      %c0_46 = arith.constant 0 : index
      %74 = vector.load %arg10[%c0_45, %c0_46] : memref<1x1xf32, #tpu.memory_space<vmem>>, vector<1x1xf32>
      %cst_47 = arith.constant 6.400000e+01 : f32
      %75 = vector.broadcast %cst_47 : f32 to vector<1x1xf32>
      %76 = arith.subf %74, %75 : vector<1x1xf32>
      %c0_48 = arith.constant 0 : index
      %c0_49 = arith.constant 0 : index
      %77 = vector.load %arg11[%c0_48, %c0_49] : memref<1x1xf32, #tpu.memory_space<vmem>>, vector<1x1xf32>
      %c0_50 = arith.constant 0 : index
      %c0_51 = arith.constant 0 : index
      %78 = vector.load %arg9[%c0_50, %c0_51] : memref<1x1xf32, #tpu.memory_space<vmem>>, vector<1x1xf32>
      %79 = arith.subf %77, %78 : vector<1x1xf32>
      %c0_52 = arith.constant 0 : index
      %c0_53 = arith.constant 0 : index
      %80 = vector.load %arg10[%c0_52, %c0_53] : memref<1x1xf32, #tpu.memory_space<vmem>>, vector<1x1xf32>
      %81 = arith.subf %79, %80 : vector<1x1xf32>
      %cst_54 = arith.constant 6.400000e+01 : f32
      %82 = vector.broadcast %cst_54 : f32 to vector<1x1xf32>
      %83 = arith.addf %81, %82 : vector<1x1xf32>
      %84 = arith.mulf %73, %76 : vector<1x1xf32>
      %cst_55 = arith.constant 4.200000e+01 : f32
      %85 = vector.broadcast %cst_55 : f32 to vector<1x1xf32>
      %86 = arith.divf %84, %85 : vector<1x1xf32>
      %87 = arith.addf %83, %86 : vector<1x1xf32>
      %c0_56 = arith.constant 0 : index
      %c0_57 = arith.constant 0 : index
      %88 = vector.load %arg12[%c0_56, %c0_57] : memref<1x1xf32, #tpu.memory_space<vmem>>, vector<1x1xf32>
      %cst_58 = arith.constant 2.000000e+00 : f32
      %89 = vector.broadcast %cst_58 : f32 to vector<1x1xf32>
      %90 = arith.mulf %89, %88 : vector<1x1xf32>
      %cst_59 = arith.constant 6.000000e+00 : f32
      %91 = vector.broadcast %cst_59 : f32 to vector<1x1xf32>
      %92 = arith.divf %90, %91 : vector<1x1xf32>
      %93 = arith.subf %87, %92 : vector<1x1xf32>
      %cst_60 = arith.constant 4.000000e+01 : f32
      %94 = vector.broadcast %cst_60 : f32 to vector<1x1xf32>
      %95 = arith.divf %93, %94 : vector<1x1xf32>
      %c0_61 = arith.constant 0 : index
      %c0_62 = arith.constant 0 : index
      %96 = vector.load %arg6[%c0_61, %c0_62] : memref<1x1xf32, #tpu.memory_space<vmem>>, vector<1x1xf32>
      tpu.vector_store %arg6[%c0_61, %c0_62], %95 {strides = array<i32>} : memref<1x1xf32, #tpu.memory_space<vmem>>, vector<1x1xf32>,
    } else {
    }
    return
  }
  func.func @transform_0(%arg0: i32, %arg1: i32) -> (i32, i32) {
    %c0_i32 = arith.constant 0 : i32
    %c0_i32_0 = arith.constant 0 : i32
    return %arg1, %c0_i32 : i32, i32
  }
  func.func @transform_1(%arg0: i32, %arg1: i32) -> (i32, i32) {
    %c0_i32 = arith.constant 0 : i32
    %c0_i32_0 = arith.constant 0 : i32
    return %arg0, %c0_i32 : i32, i32
  }
  func.func @transform_2(%arg0: i32, %arg1: i32) -> (i32, i32) {
    %c0_i32 = arith.constant 0 : i32
    %c0_i32_0 = arith.constant 0 : i32
    return %arg1, %c0_i32 : i32, i32
  }
  func.func @transform_3(%arg0: i32, %arg1: i32) -> (i32, i32) {
    %c0_i32 = arith.constant 0 : i32
    %c0_i32_0 = arith.constant 0 : i32
    return %arg0, %c0_i32 : i32, i32
  }
  func.func @transform_4(%arg0: i32, %arg1: i32) -> (i32, i32) {
    %c0_i32 = arith.constant 0 : i32
    %c0_i32_0 = arith.constant 0 : i32
    %c0_i32_1 = arith.constant 0 : i32
    return %c0_i32, %c0_i32_0 : i32, i32
  }
}

</mosaic_0001>

<llo_original>
// kernel: tpu_custom_call.1
$region0: #{tpu_custom_call.1}
  #allocation0 [shape = 'u32[]', space=smem, size = 0x4, offset = 0x4, fixed_abs, tag = 'smem constant byte address 0x4 - core index']
  #allocation1 [shape = 'u32[144,128]{1,0:T(1,128)}', space=vmem, size = 0x12000, scoped, tag = 'internal scratch']
  #allocation2 [shape = 'f32[1,8]{1,0:T(1,128)}', space=vmem, size = 0x200, scoped, tag = 'scratch operand']
  #allocation3 [shape = 'f32[1,8]{1,0:T(1,128)}', space=vmem, size = 0x200, scoped, tag = 'scratch operand']
  #allocation4 [shape = 'f32[1,1]{1,0:T(1,128)}', space=vmem, size = 0x200, scoped, tag = 'scratch operand']
  #allocation5 [shape = 'f32[1,1]{1,0:T(1,128)}', space=vmem, size = 0x200, scoped, tag = 'scratch operand']
  #allocation6 [shape = 'f32[1,1]{1,0:T(1,128)}', space=vmem, size = 0x200, scoped, tag = 'scratch operand']
  #allocation7 [shape = 'f32[1,1]{1,0:T(1,128)}', space=vmem, size = 0x200, scoped, tag = 'scratch operand']
  %s0 = inlined_call_operand.hbm [shape: f32[8,128], index: 0, kind: input, shape index: {}]
  %s1 = inlined_call_operand.hbm [shape: f32[8,128], index: 1, kind: input, shape index: {}]
  %s2 = inlined_call_operand.hbm [shape: f32[8,128], index: 2, kind: input, shape index: {}]
  %s3 = inlined_call_operand.vmem [shape: f32[8,128], index: 3, kind: input, shape index: {}]
  %s4 = inlined_call_operand.hbm [shape: f32[1,1], index: 4, kind: output, shape index: {}]
  %s5 = sld [smem:[#allocation0]]
  $region54: #{tpu_custom_call.1} parent=0
    _
  %s7 = ssub.s32 1, %s5
  %s8 = scalar_select 0, %s7, %s5
  $region1: #{tpu_custom_call.1} parent=0
    #allocation8 [shape = 'u8[4096]{0}', space=vmem, size = 0x1000, scoped, tag = 'input window, operand 0, single buffered']
    #allocation9 [shape = 's32[1]{0}', space=sflag, size = 0x4, scoped, tag = 'scoped memory for tpu_custom_call.1']
    #allocation10 [shape = 's32[1]{0}', space=sflag, size = 0x4, scoped, tag = 'scoped memory for tpu_custom_call.1']
    #allocation11 [shape = 'u8[4096]{0}', space=vmem, size = 0x1000, scoped, tag = 'input window, operand 1, single buffered']
    #allocation12 [shape = 's32[1]{0}', space=sflag, size = 0x4, scoped, tag = 'scoped memory for tpu_custom_call.1']
    #allocation13 [shape = 'u8[4096]{0}', space=vmem, size = 0x1000, scoped, tag = 'input window, operand 2, single buffered']
    #allocation14 [shape = 'u8[512]{0}', space=vmem, size = 0x400, scoped, tag = 'output window, operand 0, single buffered']
    %9 = vsyncpa [#allocation9], 0
    %10 = vsyncpa [#allocation12], 0
    %11 = vsyncpa [#allocation10], 0
    // Predicated region
    $region2: #{tpu_custom_call.1} parent=1 // pred_check
      _
    $region3: #{tpu_custom_call.1} parent=1 // pred_check_branch
      %13 = sbr.rel (0) target = $region5
    $region4: #{tpu_custom_call.1} parent=1 // pred_region
      %s15 = ssub.s32 128, 128
      %16 = vsyncadd [#allocation9], %s15
      %s18 = sshll.u32 [#allocation8], 4
      %s19 = int_to_ptr.vmem [resolvable:$true] %s18
      %21 = dma.hbm_to_vmem [thread:$0]  %s0, 128, %s19, [#allocation9]
    $region5: #{tpu_custom_call.1} parent=1 // pred_fallthru
      _
    // Predicated region
    $region6: #{tpu_custom_call.1} parent=1 // pred_check
      _
    $region7: #{tpu_custom_call.1} parent=1 // pred_check_branch
      %23 = sbr.rel (0) target = $region9
    $region8: #{tpu_custom_call.1} parent=1 // pred_region
      %s25 = ssub.s32 128, 128
      %26 = vsyncadd [#allocation12], %s25
      %s28 = sshll.u32 [#allocation11], 4
      %s29 = int_to_ptr.vmem [resolvable:$true] %s28
      %31 = dma.hbm_to_vmem [thread:$0]  %s1, 128, %s29, [#allocation12]
    $region9: #{tpu_custom_call.1} parent=1 // pred_fallthru
      _
    // Predicated region
    $region10: #{tpu_custom_call.1} parent=1 // pred_check
      _
    $region11: #{tpu_custom_call.1} parent=1 // pred_check_branch
      %33 = sbr.rel (0) target = $region13
    $region12: #{tpu_custom_call.1} parent=1 // pred_region
      %s35 = ssub.s32 128, 128
      %36 = vsyncadd [#allocation12], %s35
      %s38 = sshll.u32 [#allocation13], 4
      %s39 = int_to_ptr.vmem [resolvable:$true] %s38
      %41 = dma.hbm_to_vmem [thread:$0]  %s2, 128, %s39, [#allocation12]
    $region13: #{tpu_custom_call.1} parent=1 // pred_fallthru
      _
    // Predicated region
    $region14: #{tpu_custom_call.1} parent=1 // pred_check
      _
    $region15: #{tpu_custom_call.1} parent=1 // pred_check_branch
      %43 = sbr.rel (0) target = $region17
    $region16: #{tpu_custom_call.1} parent=1 // pred_region
      _
    $region17: #{tpu_custom_call.1} parent=1 // pred_fallthru
      _
    // Predicated region
    $region18: #{tpu_custom_call.1} parent=1 // pred_check
      _
    $region19: #{tpu_custom_call.1} parent=1 // pred_check_branch
      %45 = sbr.rel (0) target = $region21
    $region20: #{tpu_custom_call.1} parent=1 // pred_region
      %46 = dma.done [#allocation9], 128
    $region21: #{tpu_custom_call.1} parent=1 // pred_fallthru
      _
    // Predicated region
    $region22: #{tpu_custom_call.1} parent=1 // pred_check
      _
    $region23: #{tpu_custom_call.1} parent=1 // pred_check_branch
      %48 = sbr.rel (0) target = $region25
    $region24: #{tpu_custom_call.1} parent=1 // pred_region
      %49 = dma.done [#allocation12], 128
    $region25: #{tpu_custom_call.1} parent=1 // pred_fallthru
      _
    // Predicated region
    $region26: #{tpu_custom_call.1} parent=1 // pred_check
      _
    $region27: #{tpu_custom_call.1} parent=1 // pred_check_branch
      %51 = sbr.rel (0) target = $region29
    $region28: #{tpu_custom_call.1} parent=1 // pred_region
      %52 = dma.done [#allocation12], 128
    $region29: #{tpu_custom_call.1} parent=1 // pred_fallthru
      _
    %p53 = scmp.eq.s32.totalorder 0, 0
    %p54 = scmp.eq.s32.totalorder 0, 0
    %p55 = pnand %p53, %p54
    %p56 = pneg %p55
    // Predicated region
    $region30: #{tpu_custom_call.1} parent=1 // pred_check
      _
    $region31: #{tpu_custom_call.1} parent=1 // pred_check_branch
      %58 = sbr.rel (%p55) target = $region33
    $region32: #{tpu_custom_call.1} parent=1 // pred_region
      %vm59 = vcmask 0
      %60 = vst.msk [vmem:[#allocation4] sm:$0x1] %vm59, 0.0
      %61 = vst.msk [vmem:[#allocation5] sm:$0x1] %vm59, 0.0
      %62 = vst.msk [vmem:[#allocation6] sm:$0x1] %vm59, 0.0
      %63 = vst.msk [vmem:[#allocation7] sm:$0x1] %vm59, 0.0
    $region33: #{tpu_custom_call.1} parent=1 // pred_fallthru
      _
    // Predicated region
    $region34: #{tpu_custom_call.1} parent=1 // pred_check
      %p64 = pneg %p53
    $region35: #{tpu_custom_call.1} parent=1 // pred_check_branch
      %66 = sbr.rel (%p64) target = $region37
    $region36: #{tpu_custom_call.1} parent=1 // pred_region
      %vm67 = vcmask 57344
      %68 = vst.msk [vmem:[#allocation2] sm:$0x1] %vm67, 0.0
      %69 = vst.msk [vmem:[#allocation3] sm:$0x1] %vm67, 0.0
    $region37: #{tpu_custom_call.1} parent=1 // pred_fallthru
      _
    %v70 = vld [vmem:[#allocation8] sm:$0xff]
    %v71 = vld [vmem:[#allocation11] sm:$0xff]
    %72 = vmatprep.subr.mxu0 0.0
    %73 = vmatpush1.xpose.msra.mxu0 %v71
    %74 = vmatprep.subr.mxu0 0.0
    %75 = vmatpush1.xpose.msra.mxu0 0.0
    %76 = vmatprep.subr.mxu0 0.0
    %77 = vmatpush1.xpose.msra.mxu0 0.0
    %78 = vmatprep.subr.mxu0 0.0
    %79 = vmatpush1.xpose.msra.mxu0 0.0
    %80 = vmatprep.subr.mxu0 0.0
    %81 = vmatpush1.xpose.msra.mxu0 0.0
    %82 = vmatprep.subr.mxu0 0.0
    %83 = vmatpush1.xpose.msra.mxu0 0.0
    %84 = vmatprep.subr.mxu0 0.0
    %85 = vmatpush1.xpose.msra.mxu0 0.0
    %86 = vmatprep.subr.mxu0 0.0
    %87 = vmatpush1.xpose.msra.mxu0 0.0
    %88 = vmatprep.subr.mxu0 0.0
    %89 = vmatpush1.xpose.msra.mxu0 0.0
    %90 = vmatprep.subr.mxu0 0.0
    %91 = vmatpush1.xpose.msra.mxu0 0.0
    %92 = vmatprep.subr.mxu0 0.0
    %93 = vmatpush1.xpose.msra.mxu0 0.0
    %94 = vmatprep.subr.mxu0 0.0
    %95 = vmatpush1.xpose.msra.mxu0 0.0
    %96 = vmatprep.subr.mxu0 0.0
    %97 = vmatpush1.xpose.msra.mxu0 0.0
    %98 = vmatprep.subr.mxu0 0.0
    %99 = vmatpush1.xpose.msra.mxu0 0.0
    %100 = vmatprep.subr.mxu0 0.0
    %101 = vmatpush1.xpose.msra.mxu0 0.0
    %102 = vmatprep.subr.mxu0 0.0
    %103 = vmatpush1.xpose.msra.mxu0 0.0
    %104 = vmatprep.subr.mxu0 0.0
    %105 = vmatpush1.xpose.msra.mxu0 0.0
    %106 = vmatprep.subr.mxu0 0.0
    %107 = vmatpush1.xpose.msra.mxu0 0.0
    %108 = vmatprep.subr.mxu0 0.0
    %109 = vmatpush1.xpose.msra.mxu0 0.0
    %110 = vmatprep.subr.mxu0 0.0
    %111 = vmatpush1.xpose.msra.mxu0 0.0
    %112 = vmatprep.subr.mxu0 0.0
    %113 = vmatpush1.xpose.msra.mxu0 0.0
    %114 = vmatprep.subr.mxu0 0.0
    %115 = vmatpush1.xpose.msra.mxu0 0.0
    %116 = vmatprep.subr.mxu0 0.0
    %117 = vmatpush1.xpose.msra.mxu0 0.0
    %118 = vmatprep.subr.mxu0 0.0
    %119 = vmatpush1.xpose.msra.mxu0 0.0
    %120 = vmatprep.subr.mxu0 0.0
    %121 = vmatpush1.xpose.msra.mxu0 0.0
    %122 = vmatprep.subr.mxu0 0.0
    %123 = vmatpush1.xpose.msra.mxu0 0.0
    %124 = vmatprep.subr.mxu0 0.0
    %125 = vmatpush1.xpose.msra.mxu0 0.0
    %126 = vmatprep.subr.mxu0 0.0
    %127 = vmatpush1.xpose.msra.mxu0 0.0
    %128 = vmatprep.subr.mxu0 0.0
    %129 = vmatpush1.xpose.msra.mxu0 0.0
    %130 = vmatprep.subr.mxu0 0.0
    %131 = vmatpush1.xpose.msra.mxu0 0.0
    %132 = vmatprep.subr.mxu0 0.0
    %133 = vmatpush1.xpose.msra.mxu0 0.0
    %134 = vmatprep.subr.mxu0 0.0
    %135 = vmatpush1.xpose.msra.mxu0 0.0
    %136 = vmatprep.mubr.f32.mxu0 0.0
    %137 = vmatmul.mubr.f32.gmra.mrb[0].mxu0 %v70
    %v138 = vpop.f32.mrb[0].mxu0
    %v139 = vadd.f32 0.0, %v138
    %v140 = vpop.f32.mrb[0].mxu0
    %141 = vdwg.mxu0
    %v142 = vmul.f32 %v70, %v70
    %143 = vadd.xlane.f32.xlu0 %v142
    %v144 = vpop.xlane.xlu0 %143
    %v145 = vmul.f32 %v71, %v71
    %146 = vmatprep.subr.mxu0 0.0
    %147 = vmatpush1.xpose.msra.mxu0 %v145
    %148 = vmatprep.subr.mxu0 0.0
    %149 = vmatpush1.xpose.msra.mxu0 0.0
    %150 = vmatprep.subr.mxu0 0.0
    %151 = vmatpush1.xpose.msra.mxu0 0.0
    %152 = vmatprep.subr.mxu0 0.0
    %153 = vmatpush1.xpose.msra.mxu0 0.0
    %154 = vmatprep.subr.mxu0 0.0
    %155 = vmatpush1.xpose.msra.mxu0 0.0
    %156 = vmatprep.subr.mxu0 0.0
    %157 = vmatpush1.xpose.msra.mxu0 0.0
    %158 = vmatprep.subr.mxu0 0.0
    %159 = vmatpush1.xpose.msra.mxu0 0.0
    %160 = vmatprep.subr.mxu0 0.0
    %161 = vmatpush1.xpose.msra.mxu0 0.0
    %162 = vmatprep.subr.mxu0 0.0
    %163 = vmatpush1.xpose.msra.mxu0 0.0
    %164 = vmatprep.subr.mxu0 0.0
    %165 = vmatpush1.xpose.msra.mxu0 0.0
    %166 = vmatprep.subr.mxu0 0.0
    %167 = vmatpush1.xpose.msra.mxu0 0.0
    %168 = vmatprep.subr.mxu0 0.0
    %169 = vmatpush1.xpose.msra.mxu0 0.0
    %170 = vmatprep.subr.mxu0 0.0
    %171 = vmatpush1.xpose.msra.mxu0 0.0
    %172 = vmatprep.subr.mxu0 0.0
    %173 = vmatpush1.xpose.msra.mxu0 0.0
    %174 = vmatprep.subr.mxu0 0.0
    %175 = vmatpush1.xpose.msra.mxu0 0.0
    %176 = vmatprep.subr.mxu0 0.0
    %177 = vmatpush1.xpose.msra.mxu0 0.0
    %178 = vmatprep.subr.mxu0 0.0
    %179 = vmatpush1.xpose.msra.mxu0 0.0
    %180 = vmatprep.subr.mxu0 0.0
    %181 = vmatpush1.xpose.msra.mxu0 0.0
    %182 = vmatprep.subr.mxu0 0.0
    %183 = vmatpush1.xpose.msra.mxu0 0.0
    %184 = vmatprep.subr.mxu0 0.0
    %185 = vmatpush1.xpose.msra.mxu0 0.0
    %186 = vmatprep.subr.mxu0 0.0
    %187 = vmatpush1.xpose.msra.mxu0 0.0
    %188 = vmatprep.subr.mxu0 0.0
    %189 = vmatpush1.xpose.msra.mxu0 0.0
    %190 = vmatprep.subr.mxu0 0.0
    %191 = vmatpush1.xpose.msra.mxu0 0.0
    %192 = vmatprep.subr.mxu0 0.0
    %193 = vmatpush1.xpose.msra.mxu0 0.0
    %194 = vmatprep.subr.mxu0 0.0
    %195 = vmatpush1.xpose.msra.mxu0 0.0
    %196 = vmatprep.subr.mxu0 0.0
    %197 = vmatpush1.xpose.msra.mxu0 0.0
    %198 = vmatprep.subr.mxu0 0.0
    %199 = vmatpush1.xpose.msra.mxu0 0.0
    %200 = vmatprep.subr.mxu0 0.0
    %201 = vmatpush1.xpose.msra.mxu0 0.0
    %202 = vmatprep.subr.mxu0 0.0
    %203 = vmatpush1.xpose.msra.mxu0 0.0
    %204 = vmatprep.subr.mxu0 0.0
    %205 = vmatpush1.xpose.msra.mxu0 0.0
    %206 = vmatprep.subr.mxu0 0.0
    %207 = vmatpush1.xpose.msra.mxu0 0.0
    %208 = vmatprep.subr.mxu0 0.0
    %209 = vmatpush1.xpose.msra.mxu0 0.0
    %210 = vmatprep.mubr.f32.mxu0 0.0
    %211 = vmatmul.mubr.f32.gmra.mrb[0].mxu0 1.0
    %v212 = vpop.f32.mrb[0].mxu0
    %v213 = vadd.f32 0.0, %v212
    %v214 = vpop.f32.mrb[0].mxu0
    %215 = vdwg.mxu0
    %v216 = vlaneseq
    %v217 = vshrl.u32 %v216, 7
    %v218 = vsub.s32 0, %v217
    %v219 = vrot.slane %v213, %v218
    %v220 = vadd.f32 %v144, %v219
    %v221 = vmul.f32 %v139, 2.0
    %v222 = vsub.f32 %v220, %v221
    %v223 = vmul.f32 %v222, -0.013888889
    %v224 = vmul.f32 %v223, 1.442695
    %v225 = vpow.pop %v224
    %v226 = vld [vmem:[#allocation13] sm:$0xff]
    %v227 = vld [vmem:[%s3] sm:$0xff]
    %228 = vmatprep.subr.mxu0 0.0
    %229 = vmatpush1.xpose.msra.mxu0 %v227
    %230 = vmatprep.subr.mxu0 0.0
    %231 = vmatpush1.xpose.msra.mxu0 0.0
    %232 = vmatprep.subr.mxu0 0.0
    %233 = vmatpush1.xpose.msra.mxu0 0.0
    %234 = vmatprep.subr.mxu0 0.0
    %235 = vmatpush1.xpose.msra.mxu0 0.0
    %236 = vmatprep.subr.mxu0 0.0
    %237 = vmatpush1.xpose.msra.mxu0 0.0
    %238 = vmatprep.subr.mxu0 0.0
    %239 = vmatpush1.xpose.msra.mxu0 0.0
    %240 = vmatprep.subr.mxu0 0.0
    %241 = vmatpush1.xpose.msra.mxu0 0.0
    %242 = vmatprep.subr.mxu0 0.0
    %243 = vmatpush1.xpose.msra.mxu0 0.0
    %244 = vmatprep.subr.mxu0 0.0
    %245 = vmatpush1.xpose.msra.mxu0 0.0
    %246 = vmatprep.subr.mxu0 0.0
    %247 = vmatpush1.xpose.msra.mxu0 0.0
    %248 = vmatprep.subr.mxu0 0.0
    %249 = vmatpush1.xpose.msra.mxu0 0.0
    %250 = vmatprep.subr.mxu0 0.0
    %251 = vmatpush1.xpose.msra.mxu0 0.0
    %252 = vmatprep.subr.mxu0 0.0
    %253 = vmatpush1.xpose.msra.mxu0 0.0
    %254 = vmatprep.subr.mxu0 0.0
    %255 = vmatpush1.xpose.msra.mxu0 0.0
    %256 = vmatprep.subr.mxu0 0.0
    %257 = vmatpush1.xpose.msra.mxu0 0.0
    %258 = vmatprep.subr.mxu0 0.0
    %259 = vmatpush1.xpose.msra.mxu0 0.0
    %260 = vmatprep.subr.mxu0 0.0
    %261 = vmatpush1.xpose.msra.mxu0 0.0
    %262 = vmatprep.subr.mxu0 0.0
    %263 = vmatpush1.xpose.msra.mxu0 0.0
    %264 = vmatprep.subr.mxu0 0.0
    %265 = vmatpush1.xpose.msra.mxu0 0.0
    %266 = vmatprep.subr.mxu0 0.0
    %267 = vmatpush1.xpose.msra.mxu0 0.0
    %268 = vmatprep.subr.mxu0 0.0
    %269 = vmatpush1.xpose.msra.mxu0 0.0
    %270 = vmatprep.subr.mxu0 0.0
    %271 = vmatpush1.xpose.msra.mxu0 0.0
    %272 = vmatprep.subr.mxu0 0.0
    %273 = vmatpush1.xpose.msra.mxu0 0.0
    %274 = vmatprep.subr.mxu0 0.0
    %275 = vmatpush1.xpose.msra.mxu0 0.0
    %276 = vmatprep.subr.mxu0 0.0
    %277 = vmatpush1.xpose.msra.mxu0 0.0
    %278 = vmatprep.subr.mxu0 0.0
    %279 = vmatpush1.xpose.msra.mxu0 0.0
    %280 = vmatprep.subr.mxu0 0.0
    %281 = vmatpush1.xpose.msra.mxu0 0.0
    %282 = vmatprep.subr.mxu0 0.0
    %283 = vmatpush1.xpose.msra.mxu0 0.0
    %284 = vmatprep.subr.mxu0 0.0
    %285 = vmatpush1.xpose.msra.mxu0 0.0
    %286 = vmatprep.subr.mxu0 0.0
    %287 = vmatpush1.xpose.msra.mxu0 0.0
    %288 = vmatprep.subr.mxu0 0.0
    %289 = vmatpush1.xpose.msra.mxu0 0.0
    %290 = vmatprep.subr.mxu0 0.0
    %291 = vmatpush1.xpose.msra.mxu0 0.0
    %292 = vmatprep.mubr.f32.mxu0 0.0
    %293 = vmatmul.mubr.f32.gmra.mrb[0].mxu0 %v226
    %v294 = vpop.f32.mrb[0].mxu0
    %v295 = vadd.f32 0.0, %v294
    %v296 = vpop.f32.mrb[0].mxu0
    %297 = vdwg.mxu0
    %v298 = vmul.f32 %v226, %v226
    %299 = vadd.xlane.f32.xlu0 %v298
    %v300 = vpop.xlane.xlu0 %299
    %v301 = vmul.f32 %v227, %v227
    %302 = vmatprep.subr.mxu0 0.0
    %303 = vmatpush1.xpose.msra.mxu0 %v301
    %304 = vmatprep.subr.mxu0 0.0
    %305 = vmatpush1.xpose.msra.mxu0 0.0
    %306 = vmatprep.subr.mxu0 0.0
    %307 = vmatpush1.xpose.msra.mxu0 0.0
    %308 = vmatprep.subr.mxu0 0.0
    %309 = vmatpush1.xpose.msra.mxu0 0.0
    %310 = vmatprep.subr.mxu0 0.0
    %311 = vmatpush1.xpose.msra.mxu0 0.0
    %312 = vmatprep.subr.mxu0 0.0
    %313 = vmatpush1.xpose.msra.mxu0 0.0
    %314 = vmatprep.subr.mxu0 0.0
    %315 = vmatpush1.xpose.msra.mxu0 0.0
    %316 = vmatprep.subr.mxu0 0.0
    %317 = vmatpush1.xpose.msra.mxu0 0.0
    %318 = vmatprep.subr.mxu0 0.0
    %319 = vmatpush1.xpose.msra.mxu0 0.0
    %320 = vmatprep.subr.mxu0 0.0
    %321 = vmatpush1.xpose.msra.mxu0 0.0
    %322 = vmatprep.subr.mxu0 0.0
    %323 = vmatpush1.xpose.msra.mxu0 0.0
    %324 = vmatprep.subr.mxu0 0.0
    %325 = vmatpush1.xpose.msra.mxu0 0.0
    %326 = vmatprep.subr.mxu0 0.0
    %327 = vmatpush1.xpose.msra.mxu0 0.0
    %328 = vmatprep.subr.mxu0 0.0
    %329 = vmatpush1.xpose.msra.mxu0 0.0
    %330 = vmatprep.subr.mxu0 0.0
    %331 = vmatpush1.xpose.msra.mxu0 0.0
    %332 = vmatprep.subr.mxu0 0.0
    %333 = vmatpush1.xpose.msra.mxu0 0.0
    %334 = vmatprep.subr.mxu0 0.0
    %335 = vmatpush1.xpose.msra.mxu0 0.0
    %336 = vmatprep.subr.mxu0 0.0
    %337 = vmatpush1.xpose.msra.mxu0 0.0
    %338 = vmatprep.subr.mxu0 0.0
    %339 = vmatpush1.xpose.msra.mxu0 0.0
    %340 = vmatprep.subr.mxu0 0.0
    %341 = vmatpush1.xpose.msra.mxu0 0.0
    %342 = vmatprep.subr.mxu0 0.0
    %343 = vmatpush1.xpose.msra.mxu0 0.0
    %344 = vmatprep.subr.mxu0 0.0
    %345 = vmatpush1.xpose.msra.mxu0 0.0
    %346 = vmatprep.subr.mxu0 0.0
    %347 = vmatpush1.xpose.msra.mxu0 0.0
    %348 = vmatprep.subr.mxu0 0.0
    %349 = vmatpush1.xpose.msra.mxu0 0.0
    %350 = vmatprep.subr.mxu0 0.0
    %351 = vmatpush1.xpose.msra.mxu0 0.0
    %352 = vmatprep.subr.mxu0 0.0
    %353 = vmatpush1.xpose.msra.mxu0 0.0
    %354 = vmatprep.subr.mxu0 0.0
    %355 = vmatpush1.xpose.msra.mxu0 0.0
    %356 = vmatprep.subr.mxu0 0.0
    %357 = vmatpush1.xpose.msra.mxu0 0.0
    %358 = vmatprep.subr.mxu0 0.0
    %359 = vmatpush1.xpose.msra.mxu0 0.0
    %360 = vmatprep.subr.mxu0 0.0
    %361 = vmatpush1.xpose.msra.mxu0 0.0
    %362 = vmatprep.subr.mxu0 0.0
    %363 = vmatpush1.xpose.msra.mxu0 0.0
    %364 = vmatprep.subr.mxu0 0.0
    %365 = vmatpush1.xpose.msra.mxu0 0.0
    %366 = vmatprep.mubr.f32.mxu0 0.0
    %367 = vmatmul.mubr.f32.gmra.mrb[0].mxu0 1.0
    %v368 = vpop.f32.mrb[0].mxu0
    %v369 = vadd.f32 0.0, %v368
    %v370 = vpop.f32.mrb[0].mxu0
    %371 = vdwg.mxu0
    %v372 = vlaneseq
    %v373 = vshrl.u32 %v372, 7
    %v374 = vsub.s32 0, %v373
    %v375 = vrot.slane %v369, %v374
    %v376 = vadd.f32 %v300, %v375
    %v377 = vmul.f32 %v295, 2.0
    %v378 = vsub.f32 %v376, %v377
    %v379 = vmul.f32 %v378, -0.013888889
    %v380 = vmul.f32 %v379, 1.442695
    %v381 = vpow.pop %v380
    %v382 = vmul.f32 %v225, %v381
    %v383 = vld [vmem:[#allocation2] sm:$0x1]
    %vm384 = vcmask 64512
    %v385 = vsel %vm384, %v225, 0.0
    %v386 = vrot.slane %v385, 4
    %v387 = vadd.f32 %v385, %v386
    %v388 = vrot.slane %v387, 2
    %v389 = vadd.f32 %v387, %v388
    %v390 = vrot.slane %v389, 1
    %v391 = vadd.f32 %v389, %v390
    %v392 = vadd.f32 %v383, %v391
    %vm393 = vcmask 57344
    %394 = vst.msk [vmem:[#allocation2] sm:$0x1] %vm393, %v392
    %v395 = vld [vmem:[#allocation3] sm:$0x1]
    %v396 = vsel %vm384, %v381, 0.0
    %v397 = vrot.slane %v396, 4
    %v398 = vadd.f32 %v396, %v397
    %v399 = vrot.slane %v398, 2
    %v400 = vadd.f32 %v398, %v399
    %v401 = vrot.slane %v400, 1
    %v402 = vadd.f32 %v400, %v401
    %v403 = vadd.f32 %v395, %v402
    %404 = vst.msk [vmem:[#allocation3] sm:$0x1] %vm393, %v403
    %v405 = vld [vmem:[#allocation6] sm:$0x1]
    %v406 = vsel %vm384, %v382, 0.0
    %407 = vadd.xlane.f32.xlu0 %v406
    %v408 = vpop.xlane.xlu0 %407
    %v409 = vrot.slane %v408, 4
    %v410 = vadd.f32 %v408, %v409
    %v411 = vrot.slane %v410, 2
    %v412 = vadd.f32 %v410, %v411
    %v413 = vrot.slane %v412, 1
    %v414 = vadd.f32 %v412, %v413
    %s415 = vtos %v414
    %v416 = vstv %s415
    %v417 = vadd.f32 %v405, %v416
    %vm418 = vcmask 0
    %419 = vst.msk [vmem:[#allocation6] sm:$0x1] %vm418, %v417
    // Predicated region
    $region38: #{tpu_custom_call.1} parent=1 // pred_check
      %p420 = pneg %p53
    $region39: #{tpu_custom_call.1} parent=1 // pred_check_branch
      %422 = sbr.rel (%p420) target = $region41
    $region40: #{tpu_custom_call.1} parent=1 // pred_region
      %v423 = vld [vmem:[#allocation2] sm:$0x1]
      %v424 = vld [vmem:[#allocation3] sm:$0x1]
      %v425 = vsub.f32 %v423, 8.0
      %v426 = vsub.f32 %v424, 8.0
      %v427 = vld [vmem:[#allocation4] sm:$0x1]
      %v428 = vsel %vm393, %v423, 0.0
      %429 = vadd.xlane.f32.xlu0 %v428
      %v430 = vpop.xlane.xlu0 %429
      %v431 = vrot.slane %v430, 4
      %v432 = vadd.f32 %v430, %v431
      %v433 = vrot.slane %v432, 2
      %v434 = vadd.f32 %v432, %v433
      %v435 = vrot.slane %v434, 1
      %v436 = vadd.f32 %v434, %v435
      %s437 = vtos %v436
      %v438 = vstv %s437
      %v439 = vadd.f32 %v427, %v438
      %440 = vst.msk [vmem:[#allocation4] sm:$0x1] %vm418, %v439
      %v441 = vld [vmem:[#allocation5] sm:$0x1]
      %v442 = vsel %vm393, %v424, 0.0
      %443 = vadd.xlane.f32.xlu0 %v442
      %v444 = vpop.xlane.xlu0 %443
      %v445 = vrot.slane %v444, 4
      %v446 = vadd.f32 %v444, %v445
      %v447 = vrot.slane %v446, 2
      %v448 = vadd.f32 %v446, %v447
      %v449 = vrot.slane %v448, 1
      %v450 = vadd.f32 %v448, %v449
      %s451 = vtos %v450
      %v452 = vstv %s451
      %v453 = vadd.f32 %v441, %v452
      %454 = vst.msk [vmem:[#allocation5] sm:$0x1] %vm418, %v453
      %v455 = vld [vmem:[#allocation7] sm:$0x1]
      %v456 = vmul.f32 %v425, %v426
      %v457 = vsel %vm393, %v456, 0.0
      %458 = vadd.xlane.f32.xlu0 %v457
      %v459 = vpop.xlane.xlu0 %458
      %v460 = vrot.slane %v459, 4
      %v461 = vadd.f32 %v459, %v460
      %v462 = vrot.slane %v461, 2
      %v463 = vadd.f32 %v461, %v462
      %v464 = vrot.slane %v463, 1
      %v465 = vadd.f32 %v463, %v464
      %s466 = vtos %v465
      %v467 = vstv %s466
      %v468 = vadd.f32 %v455, %v467
      %469 = vst.msk [vmem:[#allocation7] sm:$0x1] %vm418, %v468
    $region41: #{tpu_custom_call.1} parent=1 // pred_fallthru
      _
    // Predicated region
    $region42: #{tpu_custom_call.1} parent=1 // pred_check
      _
    $region43: #{tpu_custom_call.1} parent=1 // pred_check_branch
      %471 = sbr.rel (%p55) target = $region45
    $region44: #{tpu_custom_call.1} parent=1 // pred_region
      %v472 = vld [vmem:[#allocation4] sm:$0x1]
      %v473 = vsub.f32 %v472, 64.0
      %v474 = vld [vmem:[#allocation5] sm:$0x1]
      %v475 = vsub.f32 %v474, 64.0
      %v476 = vld [vmem:[#allocation6] sm:$0x1]
      %v477 = vsub.f32 %v476, %v472
      %v478 = vsub.f32 %v477, %v474
      %v479 = vadd.f32 %v478, 64.0
      %v480 = vmul.f32 %v473, %v475
      %v481 = vrcp.pop 42.0
      %v482 = vmul.f32 %v480, %v481
      %v483 = vadd.f32 %v479, %v482
      %v484 = vld [vmem:[#allocation7] sm:$0x1]
      %v485 = vmul.f32 %v484, 2.0
      %v486 = vrcp.pop 6.0
      %v487 = vmul.f32 %v485, %v486
      %v488 = vsub.f32 %v483, %v487
      %v489 = vrcp.pop 40.0
      %v490 = vmul.f32 %v488, %v489
      %491 = vst.msk [vmem:[#allocation14] sm:$0x1] %vm418, %v490
    $region45: #{tpu_custom_call.1} parent=1 // pred_fallthru
      _
    // Predicated region
    $region46: #{tpu_custom_call.1} parent=1 // pred_check
      _
    $region47: #{tpu_custom_call.1} parent=1 // pred_check_branch
      %493 = sbr.rel (0) target = $region49
    $region48: #{tpu_custom_call.1} parent=1 // pred_region
      %s495 = ssub.s32 16, 16
      %496 = vsyncadd [#allocation10], %s495
      %s498 = sshll.u32 [#allocation14], 4
      %s499 = int_to_ptr.vmem [resolvable:$true] %s498
      %501 = dma.vmem_to_hbm [thread:$0]  %s499, 16, %s4, [#allocation10]
    $region49: #{tpu_custom_call.1} parent=1 // pred_fallthru
      _
    // Predicated region
    $region50: #{tpu_custom_call.1} parent=1 // pred_check
      _
    $region51: #{tpu_custom_call.1} parent=1 // pred_check_branch
      %503 = sbr.rel (0) target = $region53
    $region52: #{tpu_custom_call.1} parent=1 // pred_region
      %504 = dma.done [#allocation10], 16
    $region53: #{tpu_custom_call.1} parent=1 // pred_fallthru
      _
    %505 = vsyncpa [#allocation9], 1
    %506 = vsyncpa [#allocation12], 1
    %507 = vsyncpa [#allocation10], 1

</llo_original>
